<compile_context>
chip_gen: v6e
topology: v6e:2x2x1
jax: 0.10.0
libtpu: 0.0.40
codegen_flags: <defaults>
</compile_context>

<pallas_src>
import jax
import jax.numpy as jnp
from jax.experimental import pallas as pl
from jax.experimental.pallas import tpu as pltpu

VOC_SIZE = 3        # len(word_dict)
EMBED_SIZE = 2      # embedding_size


def _round_up(x, m):
    return (x + m - 1) // m * m


def _word2vec_kernel(x_ref, w_ref, wt_ref, o_ref, h_ref):
    # x_ref : [tb, Vp]  bf16 batch tile of (padded) inputs
    # w_ref : [Vp, Ep]  bf16 padded W.weight^T (resident across the whole grid)
    # wt_ref: [Ep, tv]  bf16 padded WT.weight^T column tile (output-vocab slice)
    # o_ref : [tb, tv]  output tile
    # h_ref : [tb, Ep]  bf16 scratch: hidden activations, cached across the j axis
    @pl.when(pl.program_id(1) == 0)
    def _():
        h = jnp.dot(x_ref[...], w_ref[...], preferred_element_type=jnp.float32)
        h_ref[...] = h.astype(h_ref.dtype)

    out = jnp.dot(h_ref[...], wt_ref[...], preferred_element_type=jnp.float32)
    o_ref[...] = out.astype(o_ref.dtype)


def prepare_word2vec_weights(w_weight, wt_weight, *, tv=512, dtype=jnp.bfloat16):
    """Pad + transpose the static weights once (hoisted out of the per-call path).

    w_weight : [E, V]  (PyTorch nn.Linear layout);  wt_weight: [V, E]
    Returns (w_t, wt_t, tv_eff):
      w_t : [Vp, Ep] == zero-padded W.weight^T   (first matmul RHS, [K, N] layout)
      wt_t: [Ep, Vp] == zero-padded WT.weight^T  (second matmul RHS, [K, N] layout)
    Zero padding is numerically exact for this bias-free two-matmul chain.
    """
    E, V = w_weight.shape
    assert wt_weight.shape == (V, E)
    Ep = _round_up(E, 128)
    Vp0 = _round_up(V, 128)
    tv_eff = min(tv, Vp0)
    assert tv_eff % 128 == 0
    Vp = _round_up(Vp0, tv_eff)
    w_t = jnp.zeros((Vp, Ep), dtype).at[:V, :E].set(w_weight.T.astype(dtype))
    wt_t = jnp.zeros((Ep, Vp), dtype).at[:E, :V].set(wt_weight.T.astype(dtype))
    return w_t, wt_t, tv_eff


def word2vec_forward(x, w_t, wt_t, *, tv, tb=256, out_dtype=None):
    """x: [B, V] float; w_t/wt_t: prepared padded-transposed weights (bf16)."""
    B, V = x.shape
    Vp, Ep = w_t.shape
    assert wt_t.shape == (Ep, Vp) and Vp % tv == 0 and V <= Vp
    out_dtype = out_dtype if out_dtype is not None else x.dtype
    cdt = w_t.dtype                       # MXU operand dtype (bf16)

    # Batch tile: multiple of 16 (bf16 sublane packing), clamped to the problem size.
    Bp0 = _round_up(B, 16)
    tb = min(tb, Bp0)
    assert tb % 16 == 0
    Bp = _round_up(Bp0, tb)

    if (Bp, Vp) == (B, V) and x.dtype == cdt:
        xp = x                            # avoid the per-call padding copy of X
    else:
        xp = jnp.zeros((Bp, Vp), cdt).at[:B, :V].set(x.astype(cdt))

    gi, gj = Bp // tb, Vp // tv

    ibytes = jnp.dtype(cdt).itemsize
    obytes = jnp.dtype(out_dtype).itemsize
    # h computed once per batch tile; X/W not re-fetched across j (block idx unchanged).
    flops = gi * 2 * tb * Vp * Ep + gi * gj * 2 * tb * Ep * tv
    bytes_accessed = ibytes * (Bp * Vp + Vp * Ep + gi * Ep * Vp) + obytes * Bp * Vp

    # VMEM budget from actual (double-buffered) tile sizes; cap for v7x (64 MiB phys).
    vmem_bytes = 2 * (tb * Vp * ibytes + Vp * Ep * ibytes + Ep * tv * ibytes
                      + tb * tv * obytes) + tb * Ep * ibytes
    vmem_limit = int(min(max(vmem_bytes * 5 // 4 + (1 << 20), 8 << 20), 48 << 20))

    out_padded = pl.pallas_call(
        _word2vec_kernel,
        out_shape=jax.ShapeDtypeStruct((Bp, Vp), out_dtype),
        grid_spec=pltpu.PrefetchScalarGridSpec(
            num_scalar_prefetch=0,
            grid=(gi, gj),
            in_specs=[
                # X batch tile; same block for every output-vocab tile j (DMA skipped)
                pl.BlockSpec((tb, Vp), lambda i, j: (i, 0)),
                # W^T fully resident (same block for all grid points)
                pl.BlockSpec((Vp, Ep), lambda i, j: (0, 0)),
                # WT^T tiled along the output-vocab columns (lane-dense)
                pl.BlockSpec((Ep, tv), lambda i, j: (0, j)),
            ],
            out_specs=pl.BlockSpec((tb, tv), lambda i, j: (i, j)),
            scratch_shapes=[pltpu.VMEM((tb, Ep), cdt)],   # cached h, carried across j
        ),
        compiler_params=pltpu.CompilerParams(
            # j MUST be "arbitrary": the h scratch is a carry across the j axis.
            dimension_semantics=("parallel", "arbitrary"),
            vmem_limit_bytes=vmem_limit,
        ),
        cost_estimate=pl.CostEstimate(
            flops=flops, transcendentals=0, bytes_accessed=bytes_accessed),
    )(xp, w_t, wt_t)

    return out_padded[:B, :V]


if __name__ == "__main__":
    key = jax.random.PRNGKey(0)
    k_x, k_w, k_wt = jax.random.split(key, 3)

    # Small shapes consistent with the module (V=3, E=2).
    batch = 32
    idx = jax.random.randint(k_x, (batch,), 0, VOC_SIZE)
    x = jax.nn.one_hot(idx, VOC_SIZE, dtype=jnp.float32)                            # [32, 3]

    # Deterministic synthetic parameters in PyTorch nn.Linear weight layout.
    w_weight = jax.random.normal(k_w, (EMBED_SIZE, VOC_SIZE), dtype=jnp.float32)    # [2, 3]
    wt_weight = jax.random.normal(k_wt, (VOC_SIZE, EMBED_SIZE), dtype=jnp.float32)  # [3, 2]

    # Weight padding/transposition is done ONCE, outside the per-call path.
    w_t, wt_t, tv = prepare_word2vec_weights(w_weight, wt_weight)

    out = word2vec_forward(x, w_t, wt_t, tv=tv)
    out = jax.block_until_ready(out)

    # Pure-JAX f32 reference; bf16 MXU operands (f32 accumulate) => loose tolerance.
    ref = (x @ w_weight.T) @ wt_weight.T
    assert out.shape == (batch, VOC_SIZE)
    assert jnp.allclose(out, ref, atol=5e-2, rtol=5e-2), float(jnp.max(jnp.abs(out - ref)))

    print("KERNEL_OK")
</pallas_src>

<mosaic_0001>
module attributes {stable_mosaic.version = 11 : i64} {
  func.func @_word2vec_kernel(%arg0: i32, %arg1: i32, %arg2: memref<32x128xbf16, #tpu.memory_space<vmem>>, %arg3: memref<128x128xbf16, #tpu.memory_space<vmem>>, %arg4: memref<128x128xbf16, #tpu.memory_space<vmem>>, %arg5: memref<32x128xf32, #tpu.memory_space<vmem>>, %arg6: memref<32x128xbf16, #tpu.memory_space<vmem>>) attributes {dimension_semantics = [#tpu.dimension_semantics<parallel>, #tpu.dimension_semantics<arbitrary>], iteration_bounds = array<i64: 1, 1>, scalar_prefetch = 0 : i64, scratch_operands = 1 : i64, tpu.core_type = #tpu.core_type<tc>, window_params = [{transform_indices = @transform_0, window_bounds = array<i64: 32, 128>}, {pipeline_mode = #tpu.pipeline_mode<synchronous>, transform_indices = @transform_1, window_bounds = array<i64: 128, 128>}, {transform_indices = @transform_2, window_bounds = array<i64: 128, 128>}, {transform_indices = @transform_3, window_bounds = array<i64: 32, 128>}]} {
    %c0_i32 = arith.constant 0 : i32
    %0 = arith.cmpi eq, %arg1, %c0_i32 : i32
    %1 = arith.extui %0 : i1 to i32
    %c0_i32_0 = arith.constant 0 : i32
    %2 = arith.cmpi ne, %1, %c0_i32_0 : i32
    scf.if %2 {
      %c0_6 = arith.constant 0 : index
      %c0_7 = arith.constant 0 : index
      %7 = vector.load %arg2[%c0_6, %c0_7] : memref<32x128xbf16, #tpu.memory_space<vmem>>, vector<32x128xbf16>
      %c0_8 = arith.constant 0 : index
      %c0_9 = arith.constant 0 : index
      %8 = vector.load %arg3[%c0_8, %c0_9] : memref<128x128xbf16, #tpu.memory_space<vmem>>, vector<128x128xbf16>
      %cst_10 = arith.constant dense<0.000000e+00> : vector<32x128xf32>
      %9 = tpu.matmul %7, %8, %cst_10 {dimension_numbers = #tpu.dot_dimension_numbers<[1], [0], [0], [1], [0, 0, 1, 1], [], []>} : vector<32x128xbf16>, vector<128x128xbf16>, vector<32x128xf32> -> vector<32x128xf32>
      %10 = arith.truncf %9 : vector<32x128xf32> to vector<32x128xbf16>
      %c0_11 = arith.constant 0 : index
      %c0_12 = arith.constant 0 : index
      %11 = vector.load %arg6[%c0_11, %c0_12] : memref<32x128xbf16, #tpu.memory_space<vmem>>, vector<32x128xbf16>
      tpu.vector_store %arg6[%c0_11, %c0_12], %10 {strides = array<i32>} : memref<32x128xbf16, #tpu.memory_space<vmem>>, vector<32x128xbf16>,
    } else {
    }
    %c0 = arith.constant 0 : index
    %c0_1 = arith.constant 0 : index
    %3 = vector.load %arg6[%c0, %c0_1] : memref<32x128xbf16, #tpu.memory_space<vmem>>, vector<32x128xbf16>
    %c0_2 = arith.constant 0 : index
    %c0_3 = arith.constant 0 : index
    %4 = vector.load %arg4[%c0_2, %c0_3] : memref<128x128xbf16, #tpu.memory_space<vmem>>, vector<128x128xbf16>
    %cst = arith.constant dense<0.000000e+00> : vector<32x128xf32>
    %5 = tpu.matmul %3, %4, %cst {dimension_numbers = #tpu.dot_dimension_numbers<[1], [0], [0], [1], [0, 0, 1, 1], [], []>} : vector<32x128xbf16>, vector<128x128xbf16>, vector<32x128xf32> -> vector<32x128xf32>
    %c0_4 = arith.constant 0 : index
    %c0_5 = arith.constant 0 : index
    %6 = vector.load %arg5[%c0_4, %c0_5] : memref<32x128xf32, #tpu.memory_space<vmem>>, vector<32x128xf32>
    tpu.vector_store %arg5[%c0_4, %c0_5], %5 {strides = array<i32>} : memref<32x128xf32, #tpu.memory_space<vmem>>, vector<32x128xf32>,
    return
  }
  func.func @transform_0(%arg0: i32, %arg1: i32) -> (i32, i32) {
    %c0_i32 = arith.constant 0 : i32
    %c0_i32_0 = arith.constant 0 : i32
    return %arg0, %c0_i32 : i32, i32
  }
  func.func @transform_1(%arg0: i32, %arg1: i32) -> (i32, i32) {
    %c0_i32 = arith.constant 0 : i32
    %c0_i32_0 = arith.constant 0 : i32
    %c0_i32_1 = arith.constant 0 : i32
    return %c0_i32, %c0_i32_0 : i32, i32
  }
  func.func @transform_2(%arg0: i32, %arg1: i32) -> (i32, i32) {
    %c0_i32 = arith.constant 0 : i32
    %c0_i32_0 = arith.constant 0 : i32
    return %c0_i32, %arg1 : i32, i32
  }
  func.func @transform_3(%arg0: i32, %arg1: i32) -> (i32, i32) {
    %c0_i32 = arith.constant 0 : i32
    return %arg0, %arg1 : i32, i32
  }
}

</mosaic_0001>

<llo_original>
// kernel: tpu_custom_call.1
$region0: #{tpu_custom_call.1}
  #allocation0 [shape = 'u32[]', space=smem, size = 0x4, offset = 0x4, fixed_abs, tag = 'smem constant byte address 0x4 - core index']
  #allocation1 [shape = 'u32[144,128]{1,0:T(1,128)}', space=vmem, size = 0x12000, scoped, tag = 'internal scratch']
  #allocation2 [shape = 'bf16[32,128]{1,0:T(8,128)(2,1)}', space=vmem, size = 0x2000, scoped, tag = 'scratch operand']
  %s0 = inlined_call_operand.hbm [shape: bf16[32,128], index: 0, kind: input, shape index: {}]
  %s1 = inlined_call_operand.hbm [shape: bf16[128,128], index: 1, kind: input, shape index: {}]
  %s2 = inlined_call_operand.hbm [shape: bf16[128,128], index: 2, kind: input, shape index: {}]
  %s3 = inlined_call_operand.hbm [shape: f32[32,128], index: 3, kind: output, shape index: {}]
  %s4 = sld [smem:[#allocation0]]
  $region38: #{tpu_custom_call.1} parent=0
    _
  %s6 = ssub.s32 1, %s4
  %s7 = scalar_select 0, %s6, %s4
  $region1: #{tpu_custom_call.1} parent=0
    #allocation3 [shape = 'u8[8192]{0}', space=vmem, size = 0x2000, scoped, tag = 'input window, operand 0, single buffered']
    #allocation4 [shape = 's32[1]{0}', space=sflag, size = 0x4, scoped, tag = 'scoped memory for tpu_custom_call.1']
    #allocation5 [shape = 's32[1]{0}', space=sflag, size = 0x4, scoped, tag = 'scoped memory for tpu_custom_call.1']
    #allocation6 [shape = 'u8[32768]{0}', space=vmem, size = 0x8000, scoped, tag = 'input window, operand 1, single buffered']
    #allocation7 [shape = 's32[1]{0}', space=sflag, size = 0x4, scoped, tag = 'scoped memory for tpu_custom_call.1']
    #allocation8 [shape = 'u8[32768]{0}', space=vmem, size = 0x8000, scoped, tag = 'input window, operand 2, single buffered']
    #allocation9 [shape = 'u8[16384]{0}', space=vmem, size = 0x4000, scoped, tag = 'output window, operand 0, single buffered']
    %8 = vsyncpa [#allocation4], 0
    %9 = vsyncpa [#allocation7], 0
    %10 = vsyncpa [#allocation5], 0
    // Predicated region
    $region2: #{tpu_custom_call.1} parent=1 // pred_check
      _
    $region3: #{tpu_custom_call.1} parent=1 // pred_check_branch
      %12 = sbr.rel (0) target = $region5
    $region4: #{tpu_custom_call.1} parent=1 // pred_region
      %s14 = ssub.s32 256, 256
      %15 = vsyncadd [#allocation4], %s14
      %s16 = sshll.u32 [#allocation3], 4
      %s17 = int_to_ptr.vmem [resolvable:$true] %s16
      %22 = dma.hbm_to_vmem [thread:$0]  %s0, 256, %s17, [#allocation4], 64, 64, 4
    $region5: #{tpu_custom_call.1} parent=1 // pred_fallthru
      _
    // Predicated region
    $region6: #{tpu_custom_call.1} parent=1 // pred_check
      _
    $region7: #{tpu_custom_call.1} parent=1 // pred_check_branch
      %24 = sbr.rel (0) target = $region9
    $region8: #{tpu_custom_call.1} parent=1 // pred_region
      %s26 = ssub.s32 1024, 1024
      %27 = vsyncadd [#allocation7], %s26
      %s28 = sshll.u32 [#allocation6], 4
      %s29 = int_to_ptr.vmem [resolvable:$true] %s28
      %34 = dma.hbm_to_vmem [thread:$0]  %s1, 1024, %s29, [#allocation7], 64, 64, 4
    $region9: #{tpu_custom_call.1} parent=1 // pred_fallthru
      _
    // Predicated region
    $region10: #{tpu_custom_call.1} parent=1 // pred_check
      _
    $region11: #{tpu_custom_call.1} parent=1 // pred_check_branch
      %36 = sbr.rel (0) target = $region13
    $region12: #{tpu_custom_call.1} parent=1 // pred_region
      %s38 = ssub.s32 1024, 1024
      %39 = vsyncadd [#allocation7], %s38
      %s40 = sshll.u32 [#allocation8], 4
      %s41 = int_to_ptr.vmem [resolvable:$true] %s40
      %46 = dma.hbm_to_vmem [thread:$0]  %s2, 1024, %s41, [#allocation7], 64, 64, 4
    $region13: #{tpu_custom_call.1} parent=1 // pred_fallthru
      _
    // Predicated region
    $region14: #{tpu_custom_call.1} parent=1 // pred_check
      _
    $region15: #{tpu_custom_call.1} parent=1 // pred_check_branch
      %48 = sbr.rel (0) target = $region17
    $region16: #{tpu_custom_call.1} parent=1 // pred_region
      %49 = dma.done [#allocation4], 256
    $region17: #{tpu_custom_call.1} parent=1 // pred_fallthru
      _
    // Predicated region
    $region18: #{tpu_custom_call.1} parent=1 // pred_check
      _
    $region19: #{tpu_custom_call.1} parent=1 // pred_check_branch
      %51 = sbr.rel (0) target = $region21
    $region20: #{tpu_custom_call.1} parent=1 // pred_region
      %52 = dma.done [#allocation7], 1024
    $region21: #{tpu_custom_call.1} parent=1 // pred_fallthru
      _
    // Predicated region
    $region22: #{tpu_custom_call.1} parent=1 // pred_check
      _
    $region23: #{tpu_custom_call.1} parent=1 // pred_check_branch
      %54 = sbr.rel (0) target = $region25
    $region24: #{tpu_custom_call.1} parent=1 // pred_region
      %55 = dma.done [#allocation7], 1024
    $region25: #{tpu_custom_call.1} parent=1 // pred_fallthru
      _
    %p57 = scmp.eq.s32.totalorder 0, 0
    // Predicated region
    $region26: #{tpu_custom_call.1} parent=1 // pred_check
      %p58 = pneg %p57
    $region27: #{tpu_custom_call.1} parent=1 // pred_check_branch
      %60 = sbr.rel (%p58) target = $region29
    $region28: #{tpu_custom_call.1} parent=1 // pred_region
      %v61 = vld [vmem:[#allocation3] sm:$0xf]
      %v62 = vld [vmem:[#allocation3 + $0x4] sm:$0xf]
      %v63 = vld [vmem:[#allocation3 + $0x8] sm:$0xf]
      %v64 = vld [vmem:[#allocation3 + $0xc] sm:$0xf]
      %v65 = vld [vmem:[#allocation6] sm:$0xf]
      %v66 = vld [vmem:[#allocation6 + $0x4] sm:$0xf]
      %v67 = vld [vmem:[#allocation6 + $0x8] sm:$0xf]
      %v68 = vld [vmem:[#allocation6 + $0xc] sm:$0xf]
      %v69 = vld [vmem:[#allocation6 + $0x10] sm:$0xf]
      %v70 = vld [vmem:[#allocation6 + $0x14] sm:$0xf]
      %v71 = vld [vmem:[#allocation6 + $0x18] sm:$0xf]
      %v72 = vld [vmem:[#allocation6 + $0x1c] sm:$0xf]
      %v73 = vld [vmem:[#allocation6 + $0x20] sm:$0xf]
      %v74 = vld [vmem:[#allocation6 + $0x24] sm:$0xf]
      %v75 = vld [vmem:[#allocation6 + $0x28] sm:$0xf]
      %v76 = vld [vmem:[#allocation6 + $0x2c] sm:$0xf]
      %v77 = vld [vmem:[#allocation6 + $0x30] sm:$0xf]
      %v78 = vld [vmem:[#allocation6 + $0x34] sm:$0xf]
      %v79 = vld [vmem:[#allocation6 + $0x38] sm:$0xf]
      %v80 = vld [vmem:[#allocation6 + $0x3c] sm:$0xf]
      %v85 = vunpack.c.l.b16 %v61
      %v86 = vunpack.c.l.b16 %v62
      %v87 = vunpack.c.l.b16 %v63
      %v88 = vunpack.c.l.b16 %v64
      %v89 = vpack.c.b16 %v86, %v85
      %v90 = vpack.c.b16 %v88, %v87
      %v109 = vunpack.c.l.b16 %v65
      %v110 = vunpack.c.l.b16 %v66
      %v111 = vunpack.c.l.b16 %v67
      %v112 = vunpack.c.l.b16 %v68
      %v113 = vunpack.c.l.b16 %v69
      %v114 = vunpack.c.l.b16 %v70
      %v115 = vunpack.c.l.b16 %v71
      %v116 = vunpack.c.l.b16 %v72
      %v117 = vunpack.c.l.b16 %v73
      %v118 = vunpack.c.l.b16 %v74
      %v119 = vunpack.c.l.b16 %v75
      %v120 = vunpack.c.l.b16 %v76
      %v121 = vunpack.c.l.b16 %v77
      %v122 = vunpack.c.l.b16 %v78
      %v123 = vunpack.c.l.b16 %v79
      %v124 = vunpack.c.l.b16 %v80
      %v125 = vpack.c.b16 %v110, %v109
      %v126 = vpack.c.b16 %v112, %v111
      %v127 = vpack.c.b16 %v114, %v113
      %v128 = vpack.c.b16 %v116, %v115
      %v129 = vpack.c.b16 %v118, %v117
      %v130 = vpack.c.b16 %v120, %v119
      %v131 = vpack.c.b16 %v122, %v121
      %v132 = vpack.c.b16 %v124, %v123
      %141 = vmatprep.subr.bf16.mxu0 0
      %142 = vmatpush1.bf16.msra.mxu0 %v132
      %143 = vmatprep.subr.bf16.mxu0 0
      %144 = vmatpush1.bf16.msra.mxu0 %v131
      %145 = vmatprep.subr.bf16.mxu0 0
      %146 = vmatpush1.bf16.msra.mxu0 %v130
      %147 = vmatprep.subr.bf16.mxu0 0
      %148 = vmatpush1.bf16.msra.mxu0 %v129
      %149 = vmatprep.subr.bf16.mxu0 0
      %150 = vmatpush1.bf16.msra.mxu0 %v128
      %151 = vmatprep.subr.bf16.mxu0 0
      %152 = vmatpush1.bf16.msra.mxu0 %v127
      %153 = vmatprep.subr.bf16.mxu0 0
      %154 = vmatpush1.bf16.msra.mxu0 %v126
      %155 = vmatprep.subr.bf16.mxu0 0
      %156 = vmatpush1.bf16.msra.mxu0 %v125
      %157 = vmatprep.subr.bf16.mxu0 0
      %158 = vmatpush2.bf16.msra.mxu0 0
      %159 = vmatprep.subr.bf16.mxu0 0
      %160 = vmatpush2.bf16.msra.mxu0 0
      %161 = vmatprep.subr.bf16.mxu0 0
      %162 = vmatpush2.bf16.msra.mxu0 0
      %163 = vmatprep.subr.bf16.mxu0 0
      %164 = vmatpush2.bf16.msra.mxu0 0
      %165 = vmatprep.subr.bf16.mxu0 0
      %166 = vmatpush2.bf16.msra.mxu0 0
      %167 = vmatprep.subr.bf16.mxu0 0
      %168 = vmatpush2.bf16.msra.mxu0 0
      %169 = vmatprep.subr.bf16.mxu0 0
      %170 = vmatpush2.bf16.msra.mxu0 0
      %171 = vmatprep.subr.bf16.mxu0 0
      %172 = vmatpush2.bf16.msra.mxu0 0
      %173 = vmatprep.mubr.bf16.mxu0 0
      %174 = vmatmul.mubr.bf16.gmra.mxu0 %v89
      %v175 = vpop.f32.mrf.mxu0
      %v176 = vadd.f32 0.0, %v175
      %v177 = vpop.f32.mrf.mxu0
      %v178 = vpop.f32.mrf.mxu0
      %v179 = vadd.f32 0.0, %v178
      %v180 = vpop.f32.mrf.mxu0
      %181 = vmatprep.mubr.bf16.mxu0 0
      %182 = vmatmul.mubr.bf16.gmra.mxu0 %v90
      %v183 = vpop.f32.mrf.mxu0
      %v184 = vadd.f32 0.0, %v183
      %v185 = vpop.f32.mrf.mxu0
      %v186 = vpop.f32.mrf.mxu0
      %v187 = vadd.f32 0.0, %v186
      %v188 = vpop.f32.mrf.mxu0
      %189 = vdwg.mxu0
      %v190 = vpack.c.bf16 %v179, %v176
      %v191 = vpack.c.bf16 %v187, %v184
      %v194 = vunpack.c.l.b16 %v190
      %v195 = vunpack.c.h.b16 %v190
      %v196 = vunpack.c.l.b16 %v191
      %v197 = vunpack.c.h.b16 %v191
      %v198 = vpack.c.b16 %v194, %v194
      %v199 = vpack.c.b16 %v195, %v195
      %v200 = vpack.c.b16 %v196, %v196
      %v201 = vpack.c.b16 %v197, %v197
      %206 = vst [vmem:[#allocation2] sm:$0xf] %v198
      %207 = vst [vmem:[#allocation2 + $0x4] sm:$0xf] %v199
      %208 = vst [vmem:[#allocation2 + $0x8] sm:$0xf] %v200
      %209 = vst [vmem:[#allocation2 + $0xc] sm:$0xf] %v201
    $region29: #{tpu_custom_call.1} parent=1 // pred_fallthru
      _
    %v210 = vld [vmem:[#allocation2] sm:$0xf]
    %v211 = vld [vmem:[#allocation2 + $0x4] sm:$0xf]
    %v212 = vld [vmem:[#allocation2 + $0x8] sm:$0xf]
    %v213 = vld [vmem:[#allocation2 + $0xc] sm:$0xf]
    %v214 = vld [vmem:[#allocation8] sm:$0xf]
    %v215 = vld [vmem:[#allocation8 + $0x4] sm:$0xf]
    %v216 = vld [vmem:[#allocation8 + $0x8] sm:$0xf]
    %v217 = vld [vmem:[#allocation8 + $0xc] sm:$0xf]
    %v218 = vld [vmem:[#allocation8 + $0x10] sm:$0xf]
    %v219 = vld [vmem:[#allocation8 + $0x14] sm:$0xf]
    %v220 = vld [vmem:[#allocation8 + $0x18] sm:$0xf]
    %v221 = vld [vmem:[#allocation8 + $0x1c] sm:$0xf]
    %v222 = vld [vmem:[#allocation8 + $0x20] sm:$0xf]
    %v223 = vld [vmem:[#allocation8 + $0x24] sm:$0xf]
    %v224 = vld [vmem:[#allocation8 + $0x28] sm:$0xf]
    %v225 = vld [vmem:[#allocation8 + $0x2c] sm:$0xf]
    %v226 = vld [vmem:[#allocation8 + $0x30] sm:$0xf]
    %v227 = vld [vmem:[#allocation8 + $0x34] sm:$0xf]
    %v228 = vld [vmem:[#allocation8 + $0x38] sm:$0xf]
    %v229 = vld [vmem:[#allocation8 + $0x3c] sm:$0xf]
    %v234 = vunpack.c.l.b16 %v210
    %v235 = vunpack.c.l.b16 %v211
    %v236 = vunpack.c.l.b16 %v212
    %v237 = vunpack.c.l.b16 %v213
    %v238 = vpack.c.b16 %v235, %v234
    %v239 = vpack.c.b16 %v237, %v236
    %v258 = vunpack.c.l.b16 %v214
    %v259 = vunpack.c.l.b16 %v215
    %v260 = vunpack.c.l.b16 %v216
    %v261 = vunpack.c.l.b16 %v217
    %v262 = vunpack.c.l.b16 %v218
    %v263 = vunpack.c.l.b16 %v219
    %v264 = vunpack.c.l.b16 %v220
    %v265 = vunpack.c.l.b16 %v221
    %v266 = vunpack.c.l.b16 %v222
    %v267 = vunpack.c.l.b16 %v223
    %v268 = vunpack.c.l.b16 %v224
    %v269 = vunpack.c.l.b16 %v225
    %v270 = vunpack.c.l.b16 %v226
    %v271 = vunpack.c.l.b16 %v227
    %v272 = vunpack.c.l.b16 %v228
    %v273 = vunpack.c.l.b16 %v229
    %v274 = vpack.c.b16 %v259, %v258
    %v275 = vpack.c.b16 %v261, %v260
    %v276 = vpack.c.b16 %v263, %v262
    %v277 = vpack.c.b16 %v265, %v264
    %v278 = vpack.c.b16 %v267, %v266
    %v279 = vpack.c.b16 %v269, %v268
    %v280 = vpack.c.b16 %v271, %v270
    %v281 = vpack.c.b16 %v273, %v272
    %290 = vmatprep.subr.bf16.mxu0 0
    %291 = vmatpush1.bf16.msra.mxu0 %v281
    %292 = vmatprep.subr.bf16.mxu0 0
    %293 = vmatpush1.bf16.msra.mxu0 %v280
    %294 = vmatprep.subr.bf16.mxu0 0
    %295 = vmatpush1.bf16.msra.mxu0 %v279
    %296 = vmatprep.subr.bf16.mxu0 0
    %297 = vmatpush1.bf16.msra.mxu0 %v278
    %298 = vmatprep.subr.bf16.mxu0 0
    %299 = vmatpush1.bf16.msra.mxu0 %v277
    %300 = vmatprep.subr.bf16.mxu0 0
    %301 = vmatpush1.bf16.msra.mxu0 %v276
    %302 = vmatprep.subr.bf16.mxu0 0
    %303 = vmatpush1.bf16.msra.mxu0 %v275
    %304 = vmatprep.subr.bf16.mxu0 0
    %305 = vmatpush1.bf16.msra.mxu0 %v274
    %306 = vmatprep.subr.bf16.mxu0 0
    %307 = vmatpush2.bf16.msra.mxu0 0
    %308 = vmatprep.subr.bf16.mxu0 0
    %309 = vmatpush2.bf16.msra.mxu0 0
    %310 = vmatprep.subr.bf16.mxu0 0
    %311 = vmatpush2.bf16.msra.mxu0 0
    %312 = vmatprep.subr.bf16.mxu0 0
    %313 = vmatpush2.bf16.msra.mxu0 0
    %314 = vmatprep.subr.bf16.mxu0 0
    %315 = vmatpush2.bf16.msra.mxu0 0
    %316 = vmatprep.subr.bf16.mxu0 0
    %317 = vmatpush2.bf16.msra.mxu0 0
    %318 = vmatprep.subr.bf16.mxu0 0
    %319 = vmatpush2.bf16.msra.mxu0 0
    %320 = vmatprep.subr.bf16.mxu0 0
    %321 = vmatpush2.bf16.msra.mxu0 0
    %322 = vmatprep.mubr.bf16.mxu0 0
    %323 = vmatmul.mubr.bf16.gmra.mxu0 %v238
    %v324 = vpop.f32.mrf.mxu0
    %v325 = vadd.f32 0.0, %v324
    %v326 = vpop.f32.mrf.mxu0
    %v327 = vpop.f32.mrf.mxu0
    %v328 = vadd.f32 0.0, %v327
    %v329 = vpop.f32.mrf.mxu0
    %330 = vmatprep.mubr.bf16.mxu0 0
    %331 = vmatmul.mubr.bf16.gmra.mxu0 %v239
    %v332 = vpop.f32.mrf.mxu0
    %v333 = vadd.f32 0.0, %v332
    %v334 = vpop.f32.mrf.mxu0
    %v335 = vpop.f32.mrf.mxu0
    %v336 = vadd.f32 0.0, %v335
    %v337 = vpop.f32.mrf.mxu0
    %338 = vdwg.mxu0
    %339 = vst [vmem:[#allocation9] sm:$0xff] %v325
    %340 = vst [vmem:[#allocation9 + $0x8] sm:$0xff] %v328
    %341 = vst [vmem:[#allocation9 + $0x10] sm:$0xff] %v333
    %342 = vst [vmem:[#allocation9 + $0x18] sm:$0xff] %v336
    // Predicated region
    $region30: #{tpu_custom_call.1} parent=1 // pred_check
      _
    $region31: #{tpu_custom_call.1} parent=1 // pred_check_branch
      %344 = sbr.rel (0) target = $region33
    $region32: #{tpu_custom_call.1} parent=1 // pred_region
      %s346 = ssub.s32 512, 512
      %347 = vsyncadd [#allocation5], %s346
      %s348 = sshll.u32 [#allocation9], 4
      %s349 = int_to_ptr.vmem [resolvable:$true] %s348
      %354 = dma.vmem_to_hbm [thread:$0]  %s349, 512, %s3, [#allocation5], 128, 128, 8
    $region33: #{tpu_custom_call.1} parent=1 // pred_fallthru
      _
    // Predicated region
    $region34: #{tpu_custom_call.1} parent=1 // pred_check
      _
    $region35: #{tpu_custom_call.1} parent=1 // pred_check_branch
      %356 = sbr.rel (0) target = $region37
    $region36: #{tpu_custom_call.1} parent=1 // pred_region
      %357 = dma.done [#allocation5], 512
    $region37: #{tpu_custom_call.1} parent=1 // pred_fallthru
      _
    %358 = vsyncpa [#allocation4], 1
    %359 = vsyncpa [#allocation7], 1
    %360 = vsyncpa [#allocation5], 1

</llo_original>
